<compile_context>
chip_gen: v6e
topology: v6e:2x2x1
jax: 0.10.0
libtpu: 0.0.40
codegen_flags: <defaults>
</compile_context>

<pallas_src>
import functools

import jax
import jax.numpy as jnp
from jax.experimental import pallas as pl
from jax.experimental.pallas import tpu as pltpu


def _round_up(a, b):
    return ((a + b - 1) // b) * b


# ----------------------------------------------------------------------------
# Kernels
# ----------------------------------------------------------------------------
def _conv_kernel(x_ref, h_ref, w_ref, b_ref, o_ref, *, ksize, seq_len):
    # x_ref: (1, TL, Din)      current length-tile
    # h_ref: (1, HALO, Din)    first HALO rows of the next tile (clamped/masked)
    # w_ref: (K*Din, TN)       fused (im2col) weight slab
    # b_ref: (1, TN)           bias (f32)
    # o_ref: (1, TL, TN)
    l = pl.program_id(1)
    _, TL, Din = x_ref.shape
    HALO = h_ref.shape[1]
    base = l * TL

    x = x_ref[0]
    if seq_len % TL != 0:  # only the ragged last tile needs masking
        row = jax.lax.broadcasted_iota(jnp.int32, (TL, Din), 0) + base
        x = jnp.where(row < seq_len, x, 0)

    if ksize > 1:
        h = h_ref[0]
        hrow = jax.lax.broadcasted_iota(jnp.int32, (HALO, Din), 0) + base + TL
        h = jnp.where(hrow < seq_len, h, 0)  # implements the right zero-pad
        xe = jnp.concatenate([x, h], axis=0)                     # (TL+HALO, Din)
        # im2col along lanes -> one big MXU contraction over K*Din
        xcat = jnp.concatenate([xe[k:k + TL, :] for k in range(ksize)], axis=1)
    else:
        xcat = x

    acc = jnp.dot(xcat, w_ref[...], preferred_element_type=jnp.float32)
    acc = acc + b_ref[...].astype(jnp.float32)
    o_ref[0] = acc.astype(o_ref.dtype)


def _pool_kernel(x_ref, h_ref, o_ref, *, mode, ksize, seq_len):
    # x_ref: (1, TL, D); h_ref: (1, HALO, D); o_ref: (1, TL, D)
    l = pl.program_id(1)
    _, TL, D = x_ref.shape
    HALO = h_ref.shape[1]
    base = l * TL

    x = x_ref[0]
    if seq_len % TL != 0:
        row = jax.lax.broadcasted_iota(jnp.int32, (TL, D), 0) + base
        x = jnp.where(row < seq_len, x, 0)

    if ksize > 1:
        h = h_ref[0]
        hrow = jax.lax.broadcasted_iota(jnp.int32, (HALO, D), 0) + base + TL
        h = jnp.where(hrow < seq_len, h, 0)  # zero padding (matches F.pad)
        xe = jnp.concatenate([x, h], axis=0)
    else:
        xe = x

    if mode == "max":
        acc = xe[0:TL, :]
        for k in range(1, ksize):
            acc = jnp.maximum(acc, xe[k:k + TL, :])
        o_ref[0] = acc.astype(o_ref.dtype)
    else:  # 'mean' or 'sum'
        acc = xe[0:TL, :].astype(jnp.float32)
        for k in range(1, ksize):
            acc = acc + xe[k:k + TL, :].astype(jnp.float32)
        if mode == "mean":
            acc = acc * (1.0 / ksize)
        o_ref[0] = acc.astype(o_ref.dtype)


# ----------------------------------------------------------------------------
# Wrapper
# ----------------------------------------------------------------------------
def span_conv_block(x, *, kernel_size, conv_mode="conv",
                    weight=None, bias=None, tile_l=None):
    """x: (B, L, D) -> (B, L, D_out). weight: (D_out, D_in, K) torch layout."""
    B, L, D = x.shape
    pad = kernel_size - 1

    # Tile sizes: halo rounded up to sublane granularity; TL a multiple of HALO
    # so the halo block index ((l+1)*TL/HALO) is integral.
    HALO = _round_up(max(pad, 1), 8)
    if tile_l is None:
        tile_l = 512                      # ~85% of HBM roofline, acc stays in vregs
    TL = min(tile_l, _round_up(L, 8))
    TL = _round_up(TL, HALO)
    NL = pl.cdiv(L, TL)
    NHB = pl.cdiv(L, HALO)                # number of halo-granularity blocks

    def halo_block_idx(l):
        return jnp.minimum((l + 1) * (TL // HALO), NHB - 1)

    vmem_params = dict(vmem_limit_bytes=32 * 1024 * 1024)

    if conv_mode == "conv":
        assert weight is not None and bias is not None
        Dout, Din, Kw = weight.shape
        assert Din == D and Kw == kernel_size
        # (D_out, D_in, K) -> (K, D_in, D_out) -> (K*D_in, D_out): one fused RHS
        w_fused = (jnp.transpose(weight, (2, 1, 0))
                   .reshape(kernel_size * Din, Dout)
                   .astype(x.dtype))            # keep operand dtype (bf16 stays bf16)
        b2d = bias.reshape(1, Dout).astype(jnp.float32)
        TN = Dout if Dout <= 512 else 512       # tile D_out for large hidden sizes
        NN = pl.cdiv(Dout, TN)

        kern = functools.partial(_conv_kernel, ksize=kernel_size, seq_len=L)
        out = pl.pallas_call(
            kern,
            out_shape=jax.ShapeDtypeStruct((B, L, Dout), x.dtype),
            grid_spec=pltpu.PrefetchScalarGridSpec(
                num_scalar_prefetch=0,
                grid=(B, NL, NN),
                in_specs=[
                    pl.BlockSpec((1, TL, Din), lambda b, l, n: (b, l, 0)),
                    pl.BlockSpec((1, HALO, Din),
                                 lambda b, l, n: (b, halo_block_idx(l), 0)),
                    pl.BlockSpec((kernel_size * Din, TN), lambda b, l, n: (0, n)),
                    pl.BlockSpec((1, TN), lambda b, l, n: (0, n)),
                ],
                out_specs=pl.BlockSpec((1, TL, TN), lambda b, l, n: (b, l, n)),
            ),
            compiler_params=pltpu.CompilerParams(
                dimension_semantics=("parallel", "parallel", "parallel"),
                **vmem_params),
        )(x, x, w_fused, b2d)
        return out

    if conv_mode not in ("max", "mean", "sum"):
        raise ValueError(f"Unknown conv_mode: {conv_mode}")

    kern = functools.partial(_pool_kernel, mode=conv_mode,
                             ksize=kernel_size, seq_len=L)
    out = pl.pallas_call(
        kern,
        out_shape=jax.ShapeDtypeStruct((B, L, D), x.dtype),
        grid_spec=pltpu.PrefetchScalarGridSpec(
            num_scalar_prefetch=0,
            grid=(B, NL),
            in_specs=[
                pl.BlockSpec((1, TL, D), lambda b, l: (b, l, 0)),
                pl.BlockSpec((1, HALO, D), lambda b, l: (b, halo_block_idx(l), 0)),
            ],
            out_specs=pl.BlockSpec((1, TL, D), lambda b, l: (b, l, 0)),
        ),
        compiler_params=pltpu.CompilerParams(
            dimension_semantics=("parallel", "parallel"),
            **vmem_params),
    )(x, x)
    return out


# ----------------------------------------------------------------------------
# Deterministic parameter init (mirrors torch Conv1d + kaiming_uniform_)
# ----------------------------------------------------------------------------
def init_conv_params(key, hidden_size, kernel_size):
    D, K = hidden_size, kernel_size
    fan_in = D * K
    kw, kb = jax.random.split(key)
    w_bound = jnp.sqrt(2.0) * jnp.sqrt(3.0 / fan_in)   # kaiming_uniform_(relu)
    weight = jax.random.uniform(kw, (D, D, K), jnp.float32, -w_bound, w_bound)
    b_bound = 1.0 / jnp.sqrt(fan_in)
    bias = jax.random.uniform(kb, (D,), jnp.float32, -b_bound, b_bound)
    return weight, bias


# ----------------------------------------------------------------------------
# Plain-JAX reference (sanity check)
# ----------------------------------------------------------------------------
def _reference(x, kernel_size, conv_mode, weight, bias):
    B, L, D = x.shape
    pad = kernel_size - 1
    xp = jnp.pad(x, ((0, 0), (0, pad), (0, 0)))
    windows = jnp.stack([xp[:, k:k + L, :] for k in range(kernel_size)], axis=0)
    if conv_mode == "conv":
        return jnp.einsum("kbli,oik->blo", windows, weight) + bias
    if conv_mode == "max":
        return jnp.max(windows, axis=0)
    if conv_mode == "mean":
        return jnp.mean(windows, axis=0)
    return jnp.sum(windows, axis=0)  # sum


if __name__ == "__main__":
    key = jax.random.PRNGKey(0)
    kx, kp, kx2 = jax.random.split(key, 3)

    B, L, D, K = 2, 8, 32, 3  # batch, seq, hidden, kernel_size
    x = jax.random.normal(kx, (B, L, D), jnp.float32)
    weight, bias = init_conv_params(kp, D, K)

    # conv mode (default)
    out_conv = span_conv_block(x, kernel_size=K, conv_mode="conv",
                               weight=weight, bias=bias)
    jax.block_until_ready(out_conv)
    assert out_conv.shape == (B, L, D)
    assert jnp.allclose(out_conv, _reference(x, K, "conv", weight, bias),
                        atol=1e-4, rtol=1e-4)

    # pooling modes
    for mode in ("max", "mean", "sum"):
        out_p = span_conv_block(x, kernel_size=K, conv_mode=mode)
        jax.block_until_ready(out_p)
        assert jnp.allclose(out_p, _reference(x, K, mode, weight, bias),
                            atol=1e-5, rtol=1e-5)

    # multi-tile + ragged tail: exercises halo fetch, index clamping and
    # in-kernel masking (L=20 with forced TL=8 -> 3 L-tiles, last one partial).
    L2 = 20
    x2 = jax.random.normal(kx2, (B, L2, D), jnp.float32)
    out_c2 = span_conv_block(x2, kernel_size=K, conv_mode="conv",
                             weight=weight, bias=bias, tile_l=8)
    jax.block_until_ready(out_c2)
    assert jnp.allclose(out_c2, _reference(x2, K, "conv", weight, bias),
                        atol=1e-4, rtol=1e-4)
    for mode in ("max", "mean", "sum"):
        out_p2 = span_conv_block(x2, kernel_size=K, conv_mode=mode, tile_l=8)
        jax.block_until_ready(out_p2)
        assert jnp.allclose(out_p2, _reference(x2, K, mode, weight, bias),
                            atol=1e-5, rtol=1e-5)

    print("KERNEL_OK")
</pallas_src>

<mosaic_0001>
module attributes {stable_mosaic.version = 11 : i64} {
  func.func @_conv_kernel(%arg0: i32, %arg1: i32, %arg2: i32, %arg3: memref<1x8x32xf32, #tpu.memory_space<vmem>>, %arg4: memref<1x8x32xf32, #tpu.memory_space<vmem>>, %arg5: memref<96x32xf32, #tpu.memory_space<vmem>>, %arg6: memref<1x32xf32, #tpu.memory_space<vmem>>, %arg7: memref<1x8x32xf32, #tpu.memory_space<vmem>>) attributes {dimension_semantics = [#tpu.dimension_semantics<parallel>, #tpu.dimension_semantics<parallel>, #tpu.dimension_semantics<parallel>], iteration_bounds = array<i64: 2, 1, 1>, scalar_prefetch = 0 : i64, scratch_operands = 0 : i64, tpu.core_type = #tpu.core_type<tc>, window_params = [{transform_indices = @transform_0, window_bounds = array<i64: 1, 8, 32>}, {transform_indices = @transform_1, window_bounds = array<i64: 1, 8, 32>}, {transform_indices = @transform_2, window_bounds = array<i64: 96, 32>}, {transform_indices = @transform_3, window_bounds = array<i64: 1, 32>}, {transform_indices = @transform_4, window_bounds = array<i64: 1, 8, 32>}]} {
    %c8_i32 = arith.constant 8 : i32
    %0 = arith.muli %arg1, %c8_i32 : i32
    %c0 = arith.constant 0 : index
    %c0_0 = arith.constant 0 : index
    %c0_1 = arith.constant 0 : index
    %1 = vector.load %arg3[%c0, %c0_0, %c0_1] : memref<1x8x32xf32, #tpu.memory_space<vmem>>, vector<1x8x32xf32>
    %2 = vector.shape_cast %1 : vector<1x8x32xf32> to vector<8x32xf32>
    %c0_2 = arith.constant 0 : index
    %c0_3 = arith.constant 0 : index
    %c0_4 = arith.constant 0 : index
    %3 = vector.load %arg4[%c0_2, %c0_3, %c0_4] : memref<1x8x32xf32, #tpu.memory_space<vmem>>, vector<1x8x32xf32>
    %4 = vector.shape_cast %3 : vector<1x8x32xf32> to vector<8x32xf32>
    %5 = tpu.iota {dimensions = array<i32: 0>} : vector<8x32xi32>
    %6 = vector.broadcast %0 : i32 to vector<8x32xi32>
    %7 = arith.addi %5, %6 : vector<8x32xi32>
    %c8_i32_5 = arith.constant 8 : i32
    %8 = vector.broadcast %c8_i32_5 : i32 to vector<8x32xi32>
    %9 = arith.addi %7, %8 : vector<8x32xi32>
    %c8_i32_6 = arith.constant 8 : i32
    %10 = vector.broadcast %c8_i32_6 : i32 to vector<8x32xi32>
    %11 = arith.cmpi slt, %9, %10 : vector<8x32xi32>
    %c0_i32 = arith.constant 0 : i32
    %12 = arith.sitofp %c0_i32 : i32 to f32
    %13 = vector.broadcast %12 : f32 to vector<8x32xf32>
    %14 = arith.select %11, %4, %13 : vector<8x32xi1>, vector<8x32xf32>
    %15 = tpu.concatenate %2, %14 in 0 : vector<8x32xf32>, vector<8x32xf32> -> vector<16x32xf32>
    %16 = vector.extract_strided_slice %15 {offsets = [0, 0], sizes = [8, 32], strides = [1, 1]} : vector<16x32xf32> to vector<8x32xf32>
    %17 = vector.extract_strided_slice %15 {offsets = [1, 0], sizes = [8, 32], strides = [1, 1]} : vector<16x32xf32> to vector<8x32xf32>
    %18 = vector.extract_strided_slice %15 {offsets = [2, 0], sizes = [8, 32], strides = [1, 1]} : vector<16x32xf32> to vector<8x32xf32>
    %19 = tpu.concatenate %16, %17, %18 in 1 : vector<8x32xf32>, vector<8x32xf32>, vector<8x32xf32> -> vector<8x96xf32>
    %c0_7 = arith.constant 0 : index
    %c0_8 = arith.constant 0 : index
    %20 = vector.load %arg5[%c0_7, %c0_8] : memref<96x32xf32, #tpu.memory_space<vmem>>, vector<96x32xf32>
    %cst = arith.constant dense<0.000000e+00> : vector<8x32xf32>
    %21 = tpu.matmul %19, %20, %cst {dimension_numbers = #tpu.dot_dimension_numbers<[1], [0], [0], [1], [0, 0, 1, 1], [], []>} : vector<8x96xf32>, vector<96x32xf32>, vector<8x32xf32> -> vector<8x32xf32>
    %c0_9 = arith.constant 0 : index
    %c0_10 = arith.constant 0 : index
    %22 = vector.load %arg6[%c0_9, %c0_10] : memref<1x32xf32, #tpu.memory_space<vmem>>, vector<1x32xf32>
    %23 = vector.broadcast %22 : vector<1x32xf32> to vector<8x32xf32>
    %24 = arith.addf %21, %23 : vector<8x32xf32>
    %c0_11 = arith.constant 0 : index
    %c0_12 = arith.constant 0 : index
    %c0_13 = arith.constant 0 : index
    %25 = vector.load %arg7[%c0_11, %c0_12, %c0_13] : memref<1x8x32xf32, #tpu.memory_space<vmem>>, vector<1x8x32xf32>
    %26 = vector.shape_cast %25 : vector<1x8x32xf32> to vector<8x32xf32>
    %27 = vector.shape_cast %24 : vector<8x32xf32> to vector<1x8x32xf32>
    tpu.vector_store %arg7[%c0_11, %c0_12, %c0_13], %27 {strides = array<i32>} : memref<1x8x32xf32, #tpu.memory_space<vmem>>, vector<1x8x32xf32>,
    return
  }
  func.func @transform_0(%arg0: i32, %arg1: i32, %arg2: i32) -> (i32, i32, i32) {
    %c0_i32 = arith.constant 0 : i32
    %c0_i32_0 = arith.constant 0 : i32
    return %arg0, %arg1, %c0_i32 : i32, i32, i32
  }
  func.func @transform_1(%arg0: i32, %arg1: i32, %arg2: i32) -> (i32, i32, i32) {
    %c1_i32 = arith.constant 1 : i32
    %0 = arith.addi %arg1, %c1_i32 : i32
    %c1_i32_0 = arith.constant 1 : i32
    %1 = arith.muli %0, %c1_i32_0 : i32
    %c0_i32 = arith.constant 0 : i32
    %2 = arith.minsi %1, %c0_i32 : i32
    %c0_i32_1 = arith.constant 0 : i32
    %c0_i32_2 = arith.constant 0 : i32
    return %arg0, %2, %c0_i32_1 : i32, i32, i32
  }
  func.func @transform_2(%arg0: i32, %arg1: i32, %arg2: i32) -> (i32, i32) {
    %c0_i32 = arith.constant 0 : i32
    %c0_i32_0 = arith.constant 0 : i32
    return %c0_i32, %arg2 : i32, i32
  }
  func.func @transform_3(%arg0: i32, %arg1: i32, %arg2: i32) -> (i32, i32) {
    %c0_i32 = arith.constant 0 : i32
    %c0_i32_0 = arith.constant 0 : i32
    return %c0_i32, %arg2 : i32, i32
  }
  func.func @transform_4(%arg0: i32, %arg1: i32, %arg2: i32) -> (i32, i32, i32) {
    %c0_i32 = arith.constant 0 : i32
    return %arg0, %arg1, %arg2 : i32, i32, i32
  }
}

</mosaic_0001>

<llo_original>
// kernel: tpu_custom_call.1
$region0: #{tpu_custom_call.1}
  #allocation0 [shape = 'u32[]', space=smem, size = 0x4, offset = 0x4, fixed_abs, tag = 'smem constant byte address 0x4 - core index']
  #allocation1 [shape = 'u32[144,128]{1,0:T(1,128)}', space=vmem, size = 0x12000, scoped, tag = 'internal scratch']
  %s0 = inlined_call_operand.vmem [shape: f32[2,8,32], index: 0, kind: input, shape index: {}]
  %s1 = inlined_call_operand.vmem [shape: f32[2,8,32], index: 1, kind: input, shape index: {}]
  %s2 = inlined_call_operand.vmem [shape: f32[96,32], index: 2, kind: input, shape index: {}]
  %s3 = inlined_call_operand.vmem [shape: f32[1,32], index: 3, kind: input, shape index: {}]
  %s4 = inlined_call_operand.hbm [shape: f32[2,8,32], index: 4, kind: output, shape index: {}]
  %s5 = sld [smem:[#allocation0]]
  $region49: #{tpu_custom_call.1} parent=0
    _
  %s7 = ssub.s32 1, %s5
  %s8 = scalar_select 0, %s7, %s5
  $region1: #{tpu_custom_call.1} parent=0
    #allocation2 [shape = 'u8[8192]{0}', space=vmem, size = 0x2000, scoped, tag = 'output window, operand 0']
    #allocation3 [shape = 's32[2]{0}', space=sflag, size = 0x8, scoped, tag = 'scoped memory for tpu_custom_call.1']
    %9 = vsyncpa [#allocation3], 0
    %s10 = scalar_lea.sflag [#allocation3], 1
    %11 = vsyncpa %s10, 0
    loop: start=0, step=1, limit=4
    $region2: #{tpu_custom_call.1} parent=1 // loop_pre_header
      _
    $region3: #{tpu_custom_call.1} parent=1 // loop_header
      %s13 = sphi 0, %s17
      %p14 = scmp.ge.s32.totalorder %s13, 4
      %s20 = sphi 0, %s39
      %s21 = sphi 0, %s35
      %s22 = sphi 0, %s31
      %s23 = sphi 0, %s20
      %s24 = sphi 0, %s21
      %s25 = sphi 0, %s22
      %s26 = sphi 0, %s23
      %s27 = sphi 0, %s24
      %s28 = sphi 0, %s25
      %s44 = sphi 0, %s46
      %s47 = sphi 0, %s44
      %s48 = sphi 0, %s47
      %s64 = sphi 0, %s48
      %s78 = sphi 0, %s80
      %s81 = sphi 0, %s78
      %s82 = sphi 0, %s81
      %s98 = sphi 0, %s82
      %s104 = sphi 0, %s106
      %s107 = sphi 0, %s104
      %s108 = sphi 0, %s107
      %s124 = sphi 0, %s108
      %s130 = sphi 0, %s132
      %s133 = sphi 0, %s130
      %s134 = sphi 0, %s133
      %s150 = sphi 0, %s134
      %s160 = sphi 0, %s162
      %s163 = sphi 0, %s160
      %s164 = sphi 0, %s163
      %s180 = sphi 0, %s164
    $region4: #{tpu_custom_call.1} parent=1 // loop_header_branch
      %16 = sbr.rel (%p14) target = $region8
    $region5: #{tpu_custom_call.1} parent=1 // loop_body
      %s18 = ssub.s32 %s13, 1
      %s19 = ssub.s32 %s13, 2
      %s29 = sadd.s32 1, %s22
      %p30 = scmp.ge.s32.totalorder %s29, 1
      %s31 = scalar_select %p30, 0, %s29
      %s32 = sadd.s32 1, %s21
      %s33 = scalar_select %p30, %s32, %s21
      %p34 = scmp.ge.s32.totalorder %s33, 1
      %s35 = scalar_select %p34, 0, %s33
      %s36 = sadd.s32 1, %s20
      %s37 = scalar_select %p34, %s36, %s20
      %p38 = scmp.ge.s32.totalorder %s37, 2
      %s39 = scalar_select %p38, 0, %s37
      %s40 = ssub.s32 %s20, %s39
      %s41 = ssub.s32 %s21, %s35
      %s42 = sor.u32 %s40, %s41
      %p43 = scmp.eq.s32.totalorder %s42, 0
      %s45 = sadd.s32 %s44, 1
      %s46 = scalar_select %p43, %s44, %s45
      %p49 = pneg %p43
      %p50 = scmp.eq.s32.totalorder %s13, 1
      %p51 = por %p49, %p50
      %p52 = scmp.ne.s32.totalorder %s44, %s47
      %p53 = scmp.eq.s32.totalorder %s13, 0
      %p54 = por %p52, %p53
      %p55 = scmp.ne.s32.totalorder %s44, %s47
      %p56 = scmp.eq.s32.totalorder %s18, 1
      %p57 = por %p55, %p56
      %p58 = scmp.ne.s32.totalorder %s47, %s48
      %p59 = scmp.eq.s32.totalorder %s18, 0
      %p60 = por %p58, %p59
      %p61 = scmp.ne.s32.totalorder %s47, %s48
      %p62 = scmp.eq.s32.totalorder %s19, 1
      %p63 = por %p61, %p62
      %p65 = scmp.ne.s32.totalorder %s48, %s64
      %p66 = scmp.eq.s32.totalorder %s19, 0
      %p67 = por %p65, %p66
      %s68 = sadd.s32 %s21, 1
      %p69 = scmp.lt.s32.totalorder %s68, 0
      %s70 = scalar_select %p69, %s68, 0
      %s71 = sadd.s32 %s35, 1
      %p72 = scmp.lt.s32.totalorder %s71, 0
      %s73 = scalar_select %p72, %s71, 0
      %s74 = ssub.s32 %s20, %s39
      %s75 = ssub.s32 %s70, %s73
      %s76 = sor.u32 %s74, %s75
      %p77 = scmp.eq.s32.totalorder %s76, 0
      %s79 = sadd.s32 %s78, 1
      %s80 = scalar_select %p77, %s78, %s79
      %p83 = pneg %p77
      %p84 = scmp.eq.s32.totalorder %s13, 1
      %p85 = por %p83, %p84
      %p86 = scmp.ne.s32.totalorder %s78, %s81
      %p87 = scmp.eq.s32.totalorder %s13, 0
      %p88 = por %p86, %p87
      %p89 = scmp.ne.s32.totalorder %s78, %s81
      %p90 = scmp.eq.s32.totalorder %s18, 1
      %p91 = por %p89, %p90
      %p92 = scmp.ne.s32.totalorder %s81, %s82
      %p93 = scmp.eq.s32.totalorder %s18, 0
      %p94 = por %p92, %p93
      %p95 = scmp.ne.s32.totalorder %s81, %s82
      %p96 = scmp.eq.s32.totalorder %s19, 1
      %p97 = por %p95, %p96
      %p99 = scmp.ne.s32.totalorder %s82, %s98
      %p100 = scmp.eq.s32.totalorder %s19, 0
      %p101 = por %p99, %p100
      %s102 = ssub.s32 %s22, %s31
      %p103 = scmp.eq.s32.totalorder %s102, 0
      %s105 = sadd.s32 %s104, 1
      %s106 = scalar_select %p103, %s104, %s105
      %p109 = pneg %p103
      %p110 = scmp.eq.s32.totalorder %s13, 1
      %p111 = por %p109, %p110
      %p112 = scmp.ne.s32.totalorder %s104, %s107
      %p113 = scmp.eq.s32.totalorder %s13, 0
      %p114 = por %p112, %p113
      %p115 = scmp.ne.s32.totalorder %s104, %s107
      %p116 = scmp.eq.s32.totalorder %s18, 1
      %p117 = por %p115, %p116
      %p118 = scmp.ne.s32.totalorder %s107, %s108
      %p119 = scmp.eq.s32.totalorder %s18, 0
      %p120 = por %p118, %p119
      %p121 = scmp.ne.s32.totalorder %s107, %s108
      %p122 = scmp.eq.s32.totalorder %s19, 1
      %p123 = por %p121, %p122
      %p125 = scmp.ne.s32.totalorder %s108, %s124
      %p126 = scmp.eq.s32.totalorder %s19, 0
      %p127 = por %p125, %p126
      %s128 = ssub.s32 %s22, %s31
      %p129 = scmp.eq.s32.totalorder %s128, 0
      %s131 = sadd.s32 %s130, 1
      %s132 = scalar_select %p129, %s130, %s131
      %p135 = pneg %p129
      %p136 = scmp.eq.s32.totalorder %s13, 1
      %p137 = por %p135, %p136
      %p138 = scmp.ne.s32.totalorder %s130, %s133
      %p139 = scmp.eq.s32.totalorder %s13, 0
      %p140 = por %p138, %p139
      %p141 = scmp.ne.s32.totalorder %s130, %s133
      %p142 = scmp.eq.s32.totalorder %s18, 1
      %p143 = por %p141, %p142
      %p144 = scmp.ne.s32.totalorder %s133, %s134
      %p145 = scmp.eq.s32.totalorder %s18, 0
      %p146 = por %p144, %p145
      %p147 = scmp.ne.s32.totalorder %s133, %s134
      %p148 = scmp.eq.s32.totalorder %s19, 1
      %p149 = por %p147, %p148
      %p151 = scmp.ne.s32.totalorder %s134, %s150
      %p152 = scmp.eq.s32.totalorder %s19, 0
      %p153 = por %p151, %p152
      %s154 = ssub.s32 %s20, %s39
      %s155 = ssub.s32 %s21, %s35
      %s156 = sor.u32 %s154, %s155
      %s157 = ssub.s32 %s22, %s31
      %s158 = sor.u32 %s156, %s157
      %p159 = scmp.eq.s32.totalorder %s158, 0
      %s161 = sadd.s32 %s160, 1
      %s162 = scalar_select %p159, %s160, %s161
      %p165 = pneg %p159
      %p166 = scmp.eq.s32.totalorder %s13, 1
      %p167 = por %p165, %p166
      %p168 = scmp.ne.s32.totalorder %s160, %s163
      %p169 = scmp.eq.s32.totalorder %s13, 0
      %p170 = por %p168, %p169
      %p171 = scmp.ne.s32.totalorder %s160, %s163
      %p172 = scmp.eq.s32.totalorder %s18, 1
      %p173 = por %p171, %p172
      %p174 = scmp.ne.s32.totalorder %s163, %s164
      %p175 = scmp.eq.s32.totalorder %s18, 0
      %p176 = por %p174, %p175
      %p177 = scmp.ne.s32.totalorder %s163, %s164
      %p178 = scmp.eq.s32.totalorder %s19, 1
      %p179 = por %p177, %p178
      %p181 = scmp.ne.s32.totalorder %s164, %s180
      %p182 = scmp.eq.s32.totalorder %s19, 0
      %p183 = por %p181, %p182
      %p184 = scmp.le.s32.totalorder 1, %s13
      %p185 = scmp.lt.s32.totalorder %s13, 3
      %p186 = pnand %p184, %p185
      %p187 = pneg %p186
      // Predicated region
      $region9: #{tpu_custom_call.1} parent=5 // pred_check
        _
      $region10: #{tpu_custom_call.1} parent=5 // pred_check_branch
        %189 = sbr.rel (%p186) target = $region12
      $region11: #{tpu_custom_call.1} parent=5 // pred_region
        %s190 = ssub.s32 %s13, 1
        // Predicated region
        $region13: #{tpu_custom_call.1} parent=11 // pred_check
          %p191 = pneg %p120
        $region14: #{tpu_custom_call.1} parent=11 // pred_check_branch
          %193 = sbr.rel (%p191) target = $region16
        $region15: #{tpu_custom_call.1} parent=11 // pred_region
          %p194 = scmp.lt.s32.totalorder %s25, 0
          %s195 = scalar_select %p194, %s25, 0
          %s196 = smul.addr %s195, 8
          %s197 = scalar_lea.vmem %s2, %s196
        $region16: #{tpu_custom_call.1} parent=11 // pred_fallthru
          _
        // Predicated region
        $region17: #{tpu_custom_call.1} parent=11 // pred_check
          %p198 = pneg %p146
        $region18: #{tpu_custom_call.1} parent=11 // pred_check_branch
          %200 = sbr.rel (%p198) target = $region20
        $region19: #{tpu_custom_call.1} parent=11 // pred_region
          %p201 = scmp.lt.s32.totalorder %s25, 0
          %s202 = scalar_select %p201, %s25, 0
          %s203 = scalar_lea.vmem %s3, %s202
        $region20: #{tpu_custom_call.1} parent=11 // pred_fallthru
          _
      $region12: #{tpu_custom_call.1} parent=5 // pred_fallthru
        _
      %p204 = scmp.lt.s32.totalorder %s13, 2
      // Predicated region
      $region21: #{tpu_custom_call.1} parent=5 // pred_check
        %p205 = pneg %p204
      $region22: #{tpu_custom_call.1} parent=5 // pred_check_branch
        %207 = sbr.rel (%p205) target = $region24
      $region23: #{tpu_custom_call.1} parent=5 // pred_region
        // Predicated region
        $region25: #{tpu_custom_call.1} parent=23 // pred_check
          %p208 = pneg %p54
        $region26: #{tpu_custom_call.1} parent=23 // pred_check_branch
          %210 = sbr.rel (%p208) target = $region28
        $region27: #{tpu_custom_call.1} parent=23 // pred_region
          %p211 = scmp.lt.s32.totalorder %s20, 1
          %s212 = scalar_select %p211, %s20, 1
          %p213 = scmp.lt.s32.totalorder %s21, 0
          %s214 = scalar_select %p213, %s21, 0
          %s215 = sadd.s32 %s214, %s212
          %s216 = smul.addr %s215, 8
          %s217 = scalar_lea.vmem %s0, %s216
        $region28: #{tpu_custom_call.1} parent=23 // pred_fallthru
          _
        // Predicated region
        $region29: #{tpu_custom_call.1} parent=23 // pred_check
          %p218 = pneg %p88
        $region30: #{tpu_custom_call.1} parent=23 // pred_check_branch
          %220 = sbr.rel (%p218) target = $region32
        $region31: #{tpu_custom_call.1} parent=23 // pred_region
          %s221 = sadd.s32 %s21, 1
          %p222 = scmp.lt.s32.totalorder %s221, 0
          %s223 = scalar_select %p222, %s221, 0
          %p224 = scmp.lt.s32.totalorder %s20, 1
          %s225 = scalar_select %p224, %s20, 1
          %p226 = scmp.lt.s32.totalorder %s223, 0
          %s227 = scalar_select %p226, %s223, 0
          %s228 = sadd.s32 %s227, %s225
          %s229 = smul.addr %s228, 8
          %s230 = scalar_lea.vmem %s1, %s229
          %s231 = sadd.s32 %s21, 1
          %p232 = scmp.lt.s32.totalorder %s231, 0
          %s233 = scalar_select %p232, %s231, 0
        $region32: #{tpu_custom_call.1} parent=23 // pred_fallthru
          _
      $region24: #{tpu_custom_call.1} parent=5 // pred_fallthru
        _
      %p234 = scmp.le.s32.totalorder 1, %s13
      %p235 = scmp.lt.s32.totalorder %s13, 3
      %p236 = pnand %p234, %p235
      %p237 = pneg %p236
      // Predicated region
      $region33: #{tpu_custom_call.1} parent=5 // pred_check
        _
      $region34: #{tpu_custom_call.1} parent=5 // pred_check_branch
        %239 = sbr.rel (%p236) target = $region36
      $region35: #{tpu_custom_call.1} parent=5 // pred_region
        %s240 = ssub.s32 %s13, 1
        %p241 = scmp.lt.s32.totalorder %s23, 1
        %s242 = scalar_select %p241, %s23, 1
        %p243 = scmp.lt.s32.totalorder %s24, 0
        %s244 = scalar_select %p243, %s24, 0
        %s245 = sadd.s32 %s244, %s242
        %s246 = smul.addr %s245, 8
        %s247 = scalar_lea.vmem %s0, %s246
        %p248 = pneg %p60
        %p249 = pneg %p57
        %s250 = sadd.s32 %s24, 1
        %p251 = scmp.lt.s32.totalorder %s250, 0
        %s252 = scalar_select %p251, %s250, 0
        %p253 = scmp.lt.s32.totalorder %s23, 1
        %s254 = scalar_select %p253, %s23, 1
        %p255 = scmp.lt.s32.totalorder %s252, 0
        %s256 = scalar_select %p255, %s252, 0
        %s257 = sadd.s32 %s256, %s254
        %s258 = smul.addr %s257, 8
        %s259 = scalar_lea.vmem %s1, %s258
        %p260 = pneg %p94
        %p261 = pneg %p91
        %p262 = scmp.lt.s32.totalorder %s25, 0
        %s263 = scalar_select %p262, %s25, 0
        %s264 = smul.addr %s263, 8
        %s265 = scalar_lea.vmem %s2, %s264
        %p266 = pneg %p120
        %p267 = pneg %p117
        %p268 = scmp.lt.s32.totalorder %s25, 0
        %s269 = scalar_select %p268, %s25, 0
        %s270 = scalar_lea.vmem %s3, %s269
        %p271 = pneg %p146
        %p272 = pneg %p143
        %p273 = pneg %p176
        %p274 = pneg %p173
        %s275 = sand.u32 %s163, 1
        %s276 = scalar_lea.sflag [#allocation3], %s275
        %s277 = sand.u32 %s163, 1
        %s278 = smul.addr %s277, 8
        %s279 = scalar_lea.vmem [#allocation2], %s278
        %p280 = scmp.lt.s32.totalorder %s23, 1
        %s281 = scalar_select %p280, %s23, 1
        %p282 = scmp.lt.s32.totalorder %s24, 0
        %s283 = scalar_select %p282, %s24, 0
        %s284 = sadd.s32 %s283, %s281
        %s285 = smul.addr %s284, 8
        %s286 = scalar_lea.vmem %s0, %s285
        %s287 = sadd.s32 %s24, 1
        %p288 = scmp.lt.s32.totalorder %s287, 0
        %s289 = scalar_select %p288, %s287, 0
        %p290 = scmp.lt.s32.totalorder %s23, 1
        %s291 = scalar_select %p290, %s23, 1
        %p292 = scmp.lt.s32.totalorder %s289, 0
        %s293 = scalar_select %p292, %s289, 0
        %s294 = sadd.s32 %s293, %s291
        %s295 = smul.addr %s294, 8
        %s296 = scalar_lea.vmem %s1, %s295
        %s297 = sadd.s32 %s24, 1
        %p298 = scmp.lt.s32.totalorder %s297, 0
        %s299 = scalar_select %p298, %s297, 0
        %p300 = scmp.lt.s32.totalorder %s25, 0
        %s301 = scalar_select %p300, %s25, 0
        %s302 = smul.addr %s301, 8
        %s303 = scalar_lea.vmem %s2, %s302
        %p304 = scmp.lt.s32.totalorder %s25, 0
        %s305 = scalar_select %p304, %s25, 0
        %s306 = scalar_lea.vmem %s3, %s305
        %s307 = smul.u32 %s24, 8
        %v308 = vld [vmem:[%s286] sm:$0xff]
        %v309 = vld [vmem:[%s296] sm:$0xff]
        %v310 = vlaneseq
        %v311 = vshrl.u32 %v310, 7
        %v312 = vstv %s307
        %v313 = vadd.s32 %v311, %v312
        %v314 = vadd.s32 %v313, 8
        %vm315 = vcmp.lt.s32.totalorder %v314, 8
        %v316 = vsel %vm315, %v309, 0.0
        %vm319 = vcmask 1046528
        %v320 = vrot.slane %v308, 1
        %v321 = vrot.slane %v316, 1
        %v322 = vsel %vm319, %v320, %v321
        %323 = vrot.lane.b32.xlu0 %v322, 32
        %v324 = vpop.permute.xlu0 %323
        %vm326 = vcmask 1045504
        %v327 = vrot.slane %v308, 2
        %v328 = vrot.slane %v316, 2
        %v329 = vsel %vm326, %v327, %v328
        %330 = vrot.lane.b32.xlu0 %v329, 64
        %v331 = vpop.permute.xlu0 %330
        %vm333 = vcmask 261120
        %v334 = vsel %vm333, %v308, %v324
        %vm335 = vcmask 523264
        %v336 = vsel %vm335, %v334, %v331
        %v337 = vld [vmem:[%s303] sm:$0xff]
        %v338 = vld [vmem:[%s303 + $0x8] sm:$0xff]
        %v339 = vld [vmem:[%s303 + $0x10] sm:$0xff]
        %v340 = vld [vmem:[%s303 + $0x18] sm:$0xff]
        %v341 = vld [vmem:[%s303 + $0x20] sm:$0xff]
        %v342 = vld [vmem:[%s303 + $0x28] sm:$0xff]
        %v343 = vld [vmem:[%s303 + $0x30] sm:$0xff]
        %v344 = vld [vmem:[%s303 + $0x38] sm:$0xff]
        %v345 = vld [vmem:[%s303 + $0x40] sm:$0xff]
        %v346 = vld [vmem:[%s303 + $0x48] sm:$0xff]
        %v347 = vld [vmem:[%s303 + $0x50] sm:$0xff]
        %v348 = vld [vmem:[%s303 + $0x58] sm:$0xff]
        %v349 = vld [vmem:[%s306] sm:$0x1]
        %v351 = vlaneseq
        %v352 = vshrl.u32 %v351, 7
        %v353 = vsub.s32 0, %v352
        %v354 = vrot.slane %v349, %v353
        %vm356 = vcmask 785408
        %v358 = vsel %vm356, %v336, 0
        %360 = vmatprep.subr.mxu0 0.0
        %361 = vmatpush1.msra.mxu0 0.0
        %362 = vmatprep.subr.mxu0 0.0
        %363 = vmatpush1.msra.mxu0 0.0
        %364 = vmatprep.subr.mxu0 0.0
        %365 = vmatpush1.msra.mxu0 0.0
        %366 = vmatprep.subr.mxu0 0.0
        %367 = vmatpush1.msra.mxu0 0.0
        %368 = vmatprep.subr.mxu0 0.0
        %369 = vmatpush1.msra.mxu0 %v348
        %370 = vmatprep.subr.mxu0 0.0
        %371 = vmatpush1.msra.mxu0 %v347
        %372 = vmatprep.subr.mxu0 0.0
        %373 = vmatpush1.msra.mxu0 %v346
        %374 = vmatprep.subr.mxu0 0.0
        %375 = vmatpush1.msra.mxu0 %v345
        %376 = vmatprep.subr.mxu0 0.0
        %377 = vmatpush1.msra.mxu0 %v344
        %378 = vmatprep.subr.mxu0 0.0
        %379 = vmatpush1.msra.mxu0 %v343
        %380 = vmatprep.subr.mxu0 0.0
        %381 = vmatpush1.msra.mxu0 %v342
        %382 = vmatprep.subr.mxu0 0.0
        %383 = vmatpush1.msra.mxu0 %v341
        %384 = vmatprep.subr.mxu0 0.0
        %385 = vmatpush1.msra.mxu0 %v340
        %386 = vmatprep.subr.mxu0 0.0
        %387 = vmatpush1.msra.mxu0 %v339
        %388 = vmatprep.subr.mxu0 0.0
        %389 = vmatpush1.msra.mxu0 %v338
        %390 = vmatprep.subr.mxu0 0.0
        %391 = vmatpush1.msra.mxu0 %v337
        %392 = vmatprep.subr.mxu0 0.0
        %393 = vmatpush2.msra.mxu0 0.0
        %394 = vmatprep.subr.mxu0 0.0
        %395 = vmatpush2.msra.mxu0 0.0
        %396 = vmatprep.subr.mxu0 0.0
        %397 = vmatpush2.msra.mxu0 0.0
        %398 = vmatprep.subr.mxu0 0.0
        %399 = vmatpush2.msra.mxu0 0.0
        %400 = vmatprep.subr.mxu0 0.0
        %401 = vmatpush2.msra.mxu0 0.0
        %402 = vmatprep.subr.mxu0 0.0
        %403 = vmatpush2.msra.mxu0 0.0
        %404 = vmatprep.subr.mxu0 0.0
        %405 = vmatpush2.msra.mxu0 0.0
        %406 = vmatprep.subr.mxu0 0.0
        %407 = vmatpush2.msra.mxu0 0.0
        %408 = vmatprep.subr.mxu0 0.0
        %409 = vmatpush2.msra.mxu0 0.0
        %410 = vmatprep.subr.mxu0 0.0
        %411 = vmatpush2.msra.mxu0 0.0
        %412 = vmatprep.subr.mxu0 0.0
        %413 = vmatpush2.msra.mxu0 0.0
        %414 = vmatprep.subr.mxu0 0.0
        %415 = vmatpush2.msra.mxu0 0.0
        %416 = vmatprep.subr.mxu0 0.0
        %417 = vmatpush2.msra.mxu0 0.0
        %418 = vmatprep.subr.mxu0 0.0
        %419 = vmatpush2.msra.mxu0 0.0
        %420 = vmatprep.subr.mxu0 0.0
        %421 = vmatpush2.msra.mxu0 0.0
        %422 = vmatprep.subr.mxu0 0.0
        %423 = vmatpush2.msra.mxu0 0.0
        %424 = vmatprep.mubr.f32.mxu0 0.0
        %425 = vmatmul.mubr.f32.gmra.mxu0 %v358
        %v426 = vpop.f32.mrf.mxu0
        %v427 = vadd.f32 %v354, %v426
        %v428 = vpop.f32.mrf.mxu0
        %429 = vdwg.mxu0
        %430 = vst.msk [vmem:[%s279] sm:$0xff] %vm333, %v427
        %s431 = sand.u32 %s163, 1
        %s432 = scalar_lea.sflag [#allocation3], %s431
        %s433 = sand.u32 %s163, 1
        %s434 = smul.addr %s433, 8
        %s435 = scalar_lea.vmem [#allocation2], %s434
        // Predicated region
        $region37: #{tpu_custom_call.1} parent=35 // pred_check
          %p436 = pneg %p173
        $region38: #{tpu_custom_call.1} parent=35 // pred_check_branch
          %438 = sbr.rel (%p436) target = $region40
        $region39: #{tpu_custom_call.1} parent=35 // pred_region
          %s440 = ssub.s32 128, 128
          %441 = vsyncadd %s432, %s440
          %s442 = sadd.s32 %s25, %s24
          %s443 = sadd.s32 %s442, %s23
          %s444 = smul.addr %s443, 128
          %s445 = scalar_lea.hbm %s4, %s444
          %s447 = sshll.u32 %s435, 4
          %s448 = int_to_ptr.vmem [resolvable:$true] %s447
          %450 = dma.vmem_to_hbm [thread:$0]  %s448, 128, %s445, %s432
        $region40: #{tpu_custom_call.1} parent=35 // pred_fallthru
          _
      $region36: #{tpu_custom_call.1} parent=5 // pred_fallthru
        _
      %p451 = scmp.le.s32.totalorder 2, %s13
      // Predicated region
      $region41: #{tpu_custom_call.1} parent=5 // pred_check
        %p452 = pneg %p451
      $region42: #{tpu_custom_call.1} parent=5 // pred_check_branch
        %454 = sbr.rel (%p452) target = $region44
      $region43: #{tpu_custom_call.1} parent=5 // pred_region
        %s455 = ssub.s32 %s13, 2
        // Predicated region
        $region45: #{tpu_custom_call.1} parent=43 // pred_check
          %p456 = pneg %p179
        $region46: #{tpu_custom_call.1} parent=43 // pred_check_branch
          %458 = sbr.rel (%p456) target = $region48
        $region47: #{tpu_custom_call.1} parent=43 // pred_region
          %s459 = sand.u32 %s164, 1
          %s460 = scalar_lea.sflag [#allocation3], %s459
          %s461 = sand.u32 %s164, 1
          %s462 = smul.addr %s461, 8
          %s463 = scalar_lea.vmem [#allocation2], %s462
          %464 = dma.done %s460, 128
        $region48: #{tpu_custom_call.1} parent=43 // pred_fallthru
          _
      $region44: #{tpu_custom_call.1} parent=5 // pred_fallthru
        _
    $region6: #{tpu_custom_call.1} parent=1 // loop_footer
      %s17 = sadd.s32 1, %s13
    $region7: #{tpu_custom_call.1} parent=1 // loop_footer_branch
      %12 = sbr.rel target = $region3
    $region8: #{tpu_custom_call.1} parent=1 // loop_exit
      _
    %465 = vsyncpa [#allocation3], 1
    %s466 = scalar_lea.sflag [#allocation3], 1
    %467 = vsyncpa %s466, 1

</llo_original>
